<compile_context>
chip_gen: v5e
topology: v5e:2x2
jax: 0.10.0
libtpu: 0.0.40
codegen_flags: <defaults>
</compile_context>

<pallas_src>
import jax
import jax.numpy as jnp
from jax.experimental import pallas as pl
from jax.experimental.pallas import tpu as pltpu

BN_EPS = 1e-5
NEG_SLOPE = 0.2
LANE = 128
SUBLANE = 8
TILE_M = 512                      # im2col rows per grid step (fits VMEM on v7x too)
VMEM_LIMIT = 48 * 1024 * 1024     # explicit scoped-VMEM budget (safe for v7x's 64 MiB)


def _round_up(x, m):
    return (x + m - 1) // m * m


# ---------- Pass 1: conv-as-matmul + per-channel sum / sum-of-squares --------------
def conv_stats_kernel(p_ref, w_ref, y_ref, sum_ref, ssq_ref):
    i = pl.program_id(0)

    @pl.when(i == 0)
    def _():
        sum_ref[...] = jnp.zeros_like(sum_ref)
        ssq_ref[...] = jnp.zeros_like(ssq_ref)

    # bf16 operands, f32 accumulation on the MXU.
    acc = jnp.dot(p_ref[...], w_ref[...], preferred_element_type=jnp.float32)
    y_ref[...] = acc
    # Global BN statistics, accumulated across the (arbitrary) M grid axis.
    sum_ref[...] += jnp.sum(acc, axis=0, keepdims=True)
    ssq_ref[...] += jnp.sum(acc * acc, axis=0, keepdims=True)


# ---------- Pass 2: BN folded to scale/shift + LeakyReLU ---------------------------
def bn_lrelu_kernel(y_ref, scale_ref, shift_ref, o_ref):
    y = y_ref[...] * scale_ref[...] + shift_ref[...]
    o_ref[...] = jnp.where(y > 0, y, NEG_SLOPE * y).astype(o_ref.dtype)


def im2col(x, kh=4, kw=4, stride=2, pad=1):
    """x: (N, Cin, H, W) -> patches (N*Hout*Wout, Cin*kh*kw), plus (Hout, Wout)."""
    n, cin, h, w = x.shape
    hout = (h + 2 * pad - kh) // stride + 1
    wout = (w + 2 * pad - kw) // stride + 1
    xp = jnp.pad(x, ((0, 0), (0, 0), (pad, pad), (pad, pad)))
    taps = []
    for i in range(kh):
        for j in range(kw):
            taps.append(xp[:, :, i:i + stride * hout:stride, j:j + stride * wout:stride])
    # (kh*kw, N, Cin, Hout, Wout) -> (N, Hout, Wout, Cin, kh*kw); K order = (cin, kh, kw)
    p = jnp.stack(taps, axis=0).transpose(1, 3, 4, 2, 0)
    p = p.reshape(n * hout * wout, cin * kh * kw)
    return p, hout, wout


@jax.jit
def down_block(x, conv_w, gamma, beta):
    """x: (N, Cin, H, W); conv_w: (Cout, Cin, 4, 4); gamma/beta: (Cout,). Returns NCHW."""
    n, cin, h, w = x.shape
    cout, _, kh, kw = conv_w.shape

    # im2col emitted in bf16 (halves patch HBM traffic; matmul accumulates in f32).
    # TODO(synk): for very large inputs, build patches in-kernel from HBM (pl.ANY +
    # strided DMAs) instead of materializing the full (M, K) array.
    patches, hout, wout = im2col(x.astype(jnp.bfloat16), kh, kw, 2, 1)
    m, k = patches.shape

    # MXU / lane-density padding.
    kp = _round_up(k, LANE)
    cp = _round_up(cout, LANE)
    tm = min(TILE_M, _round_up(m, SUBLANE))
    mp = _round_up(m, tm)
    n_tiles = mp // tm

    patches = jnp.pad(patches, ((0, mp - m), (0, kp - k)))
    w_mat = conv_w.reshape(cout, cin * kh * kw).T.astype(jnp.bfloat16)   # (K, Cout)
    w_mat = jnp.pad(w_mat, ((0, kp - k), (0, cp - cout)))
    gamma_p = jnp.pad(gamma.astype(jnp.float32), (0, cp - cout)).reshape(1, cp)
    beta_p = jnp.pad(beta.astype(jnp.float32), (0, cp - cout)).reshape(1, cp)

    cost1 = pl.CostEstimate(
        flops=2 * mp * kp * cp,
        transcendentals=0,
        bytes_accessed=mp * kp * 2 + kp * cp * 2 + mp * cp * 4 + 2 * cp * 4,
    )

    conv_out, ch_sum, ch_ssq = pl.pallas_call(
        conv_stats_kernel,
        out_shape=(
            jax.ShapeDtypeStruct((mp, cp), jnp.float32),   # conv output (intermediate)
            jax.ShapeDtypeStruct((1, cp), jnp.float32),    # per-channel sum
            jax.ShapeDtypeStruct((1, cp), jnp.float32),    # per-channel sum of squares
        ),
        grid_spec=pltpu.PrefetchScalarGridSpec(
            num_scalar_prefetch=0,
            grid=(n_tiles,),
            in_specs=[
                pl.BlockSpec((tm, kp), lambda i: (i, 0)),   # patch tile (pipelined)
                pl.BlockSpec((kp, cp), lambda i: (0, 0)),   # weights stay resident
            ],
            out_specs=(
                pl.BlockSpec((tm, cp), lambda i: (i, 0)),
                pl.BlockSpec((1, cp), lambda i: (0, 0)),    # resident accumulator
                pl.BlockSpec((1, cp), lambda i: (0, 0)),    # resident accumulator
            ),
        ),
        compiler_params=pltpu.CompilerParams(
            dimension_semantics=("arbitrary",),             # stats accumulate across M
            vmem_limit_bytes=VMEM_LIMIT,
        ),
        cost_estimate=cost1,
    )(patches, w_mat)

    # Fold train-mode BN (biased variance over N*Hout*Wout) into one FMA per element.
    inv_m = 1.0 / float(m)
    mean = ch_sum * inv_m
    var = jnp.maximum(ch_ssq * inv_m - mean * mean, 0.0)
    scale = gamma_p * jax.lax.rsqrt(var + BN_EPS)
    shift = beta_p - mean * scale

    out_flat = pl.pallas_call(
        bn_lrelu_kernel,
        out_shape=jax.ShapeDtypeStruct((mp, cp), jnp.float32),
        grid_spec=pltpu.PrefetchScalarGridSpec(
            num_scalar_prefetch=0,
            grid=(n_tiles,),
            in_specs=[
                pl.BlockSpec((tm, cp), lambda i: (i, 0)),
                pl.BlockSpec((1, cp), lambda i: (0, 0)),
                pl.BlockSpec((1, cp), lambda i: (0, 0)),
            ],
            out_specs=pl.BlockSpec((tm, cp), lambda i: (i, 0)),
        ),
        compiler_params=pltpu.CompilerParams(
            dimension_semantics=("parallel",),               # megacore-shardable
            vmem_limit_bytes=VMEM_LIMIT,
        ),
    )(conv_out, scale, shift)

    out = out_flat[:m, :cout].reshape(n, hout, wout, cout)
    # TODO(synk): in a full NHWC pipeline this transpose should be dropped / moved to
    # the graph boundary; kept here to match the PyTorch NCHW forward contract.
    return out.transpose(0, 3, 1, 2)


def reference(x, conv_w, gamma, beta):
    """Pure-JAX f32 reference (conv + train-mode BN + LeakyReLU)."""
    y = jax.lax.conv_general_dilated(
        x, conv_w, window_strides=(2, 2), padding=((1, 1), (1, 1)),
        dimension_numbers=("NCHW", "OIHW", "NCHW"))
    mean = jnp.mean(y, axis=(0, 2, 3), keepdims=True)
    var = jnp.mean((y - mean) ** 2, axis=(0, 2, 3), keepdims=True)
    yn = (y - mean) * jax.lax.rsqrt(var + BN_EPS)
    yn = yn * gamma.reshape(1, -1, 1, 1) + beta.reshape(1, -1, 1, 1)
    return jnp.where(yn > 0, yn, NEG_SLOPE * yn)


if __name__ == "__main__":
    key = jax.random.PRNGKey(0)
    k_x, k_w, k_g, k_b = jax.random.split(key, 4)

    N, CIN, H, W = 2, 4, 16, 16
    COUT = 8

    x = jax.random.normal(k_x, (N, CIN, H, W), dtype=jnp.float32)
    conv_w = 0.1 * jax.random.normal(k_w, (COUT, CIN, 4, 4), dtype=jnp.float32)
    gamma = 1.0 + 0.05 * jax.random.normal(k_g, (COUT,), dtype=jnp.float32)
    beta = 0.05 * jax.random.normal(k_b, (COUT,), dtype=jnp.float32)

    out = jax.block_until_ready(down_block(x, conv_w, gamma, beta))
    ref = jax.block_until_ready(reference(x, conv_w, gamma, beta))

    assert out.shape == (N, COUT, H // 2, W // 2)
    # bf16 matmul operands (f32 accumulation) vs f32 reference -> loosened tolerance.
    assert jnp.allclose(out, ref, atol=3e-2, rtol=3e-2), float(jnp.max(jnp.abs(out - ref)))

    print("KERNEL_OK")
</pallas_src>

<mosaic_0001>
module attributes {stable_mosaic.version = 11 : i64} {
  func.func @conv_stats_kernel(%arg0: i32, %arg1: memref<128x128xbf16, #tpu.memory_space<vmem>>, %arg2: memref<128x128xbf16, #tpu.memory_space<vmem>>, %arg3: memref<128x128xf32, #tpu.memory_space<vmem>>, %arg4: memref<1x128xf32, #tpu.memory_space<vmem>>, %arg5: memref<1x128xf32, #tpu.memory_space<vmem>>) attributes {dimension_semantics = [#tpu.dimension_semantics<arbitrary>], iteration_bounds = array<i64: 1>, scalar_prefetch = 0 : i64, scratch_operands = 0 : i64, tpu.core_type = #tpu.core_type<tc>, window_params = [{transform_indices = @transform_0, window_bounds = array<i64: 128, 128>}, {pipeline_mode = #tpu.pipeline_mode<synchronous>, transform_indices = @transform_1, window_bounds = array<i64: 128, 128>}, {transform_indices = @transform_2, window_bounds = array<i64: 128, 128>}, {pipeline_mode = #tpu.pipeline_mode<synchronous>, transform_indices = @transform_3, window_bounds = array<i64: 1, 128>}, {pipeline_mode = #tpu.pipeline_mode<synchronous>, transform_indices = @transform_4, window_bounds = array<i64: 1, 128>}]} {
    %c0_i32 = arith.constant 0 : i32
    %0 = arith.cmpi eq, %arg0, %c0_i32 : i32
    %1 = arith.extui %0 : i1 to i32
    %c0_i32_0 = arith.constant 0 : i32
    %2 = arith.cmpi ne, %1, %c0_i32_0 : i32
    scf.if %2 {
      %cst_16 = arith.constant 0.000000e+00 : f32
      %18 = vector.broadcast %cst_16 : f32 to vector<1x128xf32>
      %c0_17 = arith.constant 0 : index
      %c0_18 = arith.constant 0 : index
      %19 = vector.load %arg4[%c0_17, %c0_18] : memref<1x128xf32, #tpu.memory_space<vmem>>, vector<1x128xf32>
      tpu.vector_store %arg4[%c0_17, %c0_18], %18 {strides = array<i32>} : memref<1x128xf32, #tpu.memory_space<vmem>>, vector<1x128xf32>,
      %cst_19 = arith.constant 0.000000e+00 : f32
      %20 = vector.broadcast %cst_19 : f32 to vector<1x128xf32>
      %c0_20 = arith.constant 0 : index
      %c0_21 = arith.constant 0 : index
      %21 = vector.load %arg5[%c0_20, %c0_21] : memref<1x128xf32, #tpu.memory_space<vmem>>, vector<1x128xf32>
      tpu.vector_store %arg5[%c0_20, %c0_21], %20 {strides = array<i32>} : memref<1x128xf32, #tpu.memory_space<vmem>>, vector<1x128xf32>,
    } else {
    }
    %c0 = arith.constant 0 : index
    %c0_1 = arith.constant 0 : index
    %3 = vector.load %arg1[%c0, %c0_1] : memref<128x128xbf16, #tpu.memory_space<vmem>>, vector<128x128xbf16>
    %c0_2 = arith.constant 0 : index
    %c0_3 = arith.constant 0 : index
    %4 = vector.load %arg2[%c0_2, %c0_3] : memref<128x128xbf16, #tpu.memory_space<vmem>>, vector<128x128xbf16>
    %cst = arith.constant dense<0.000000e+00> : vector<128x128xf32>
    %5 = tpu.matmul %3, %4, %cst {dimension_numbers = #tpu.dot_dimension_numbers<[1], [0], [0], [1], [0, 0, 1, 1], [], []>} : vector<128x128xbf16>, vector<128x128xbf16>, vector<128x128xf32> -> vector<128x128xf32>
    %c0_4 = arith.constant 0 : index
    %c0_5 = arith.constant 0 : index
    %6 = vector.load %arg3[%c0_4, %c0_5] : memref<128x128xf32, #tpu.memory_space<vmem>>, vector<128x128xf32>
    tpu.vector_store %arg3[%c0_4, %c0_5], %5 {strides = array<i32>} : memref<128x128xf32, #tpu.memory_space<vmem>>, vector<128x128xf32>,
    %c0_6 = arith.constant 0 : index
    %c0_7 = arith.constant 0 : index
    %7 = vector.load %arg4[%c0_6, %c0_7] : memref<1x128xf32, #tpu.memory_space<vmem>>, vector<1x128xf32>
    %cst_8 = arith.constant dense<0.000000e+00> : vector<128xf32>
    %8 = vector.multi_reduction <add>, %5, %cst_8 [0] : vector<128x128xf32> to vector<128xf32>
    %9 = vector.shape_cast %8 : vector<128xf32> to vector<1x128xf32>
    %10 = arith.addf %7, %9 : vector<1x128xf32>
    %c0_9 = arith.constant 0 : index
    %c0_10 = arith.constant 0 : index
    %11 = vector.load %arg4[%c0_9, %c0_10] : memref<1x128xf32, #tpu.memory_space<vmem>>, vector<1x128xf32>
    tpu.vector_store %arg4[%c0_9, %c0_10], %10 {strides = array<i32>} : memref<1x128xf32, #tpu.memory_space<vmem>>, vector<1x128xf32>,
    %c0_11 = arith.constant 0 : index
    %c0_12 = arith.constant 0 : index
    %12 = vector.load %arg5[%c0_11, %c0_12] : memref<1x128xf32, #tpu.memory_space<vmem>>, vector<1x128xf32>
    %13 = arith.mulf %5, %5 : vector<128x128xf32>
    %cst_13 = arith.constant dense<0.000000e+00> : vector<128xf32>
    %14 = vector.multi_reduction <add>, %13, %cst_13 [0] : vector<128x128xf32> to vector<128xf32>
    %15 = vector.shape_cast %14 : vector<128xf32> to vector<1x128xf32>
    %16 = arith.addf %12, %15 : vector<1x128xf32>
    %c0_14 = arith.constant 0 : index
    %c0_15 = arith.constant 0 : index
    %17 = vector.load %arg5[%c0_14, %c0_15] : memref<1x128xf32, #tpu.memory_space<vmem>>, vector<1x128xf32>
    tpu.vector_store %arg5[%c0_14, %c0_15], %16 {strides = array<i32>} : memref<1x128xf32, #tpu.memory_space<vmem>>, vector<1x128xf32>,
    return
  }
  func.func @transform_0(%arg0: i32) -> (i32, i32) {
    %c0_i32 = arith.constant 0 : i32
    %c0_i32_0 = arith.constant 0 : i32
    return %arg0, %c0_i32 : i32, i32
  }
  func.func @transform_1(%arg0: i32) -> (i32, i32) {
    %c0_i32 = arith.constant 0 : i32
    %c0_i32_0 = arith.constant 0 : i32
    %c0_i32_1 = arith.constant 0 : i32
    return %c0_i32, %c0_i32_0 : i32, i32
  }
  func.func @transform_2(%arg0: i32) -> (i32, i32) {
    %c0_i32 = arith.constant 0 : i32
    %c0_i32_0 = arith.constant 0 : i32
    return %arg0, %c0_i32 : i32, i32
  }
  func.func @transform_3(%arg0: i32) -> (i32, i32) {
    %c0_i32 = arith.constant 0 : i32
    %c0_i32_0 = arith.constant 0 : i32
    %c0_i32_1 = arith.constant 0 : i32
    return %c0_i32, %c0_i32_0 : i32, i32
  }
  func.func @transform_4(%arg0: i32) -> (i32, i32) {
    %c0_i32 = arith.constant 0 : i32
    %c0_i32_0 = arith.constant 0 : i32
    %c0_i32_1 = arith.constant 0 : i32
    return %c0_i32, %c0_i32_0 : i32, i32
  }
}

module attributes {stable_mosaic.version = 11 : i64} {
  func.func @bn_lrelu_kernel(%arg0: i32, %arg1: memref<128x128xf32, #tpu.memory_space<vmem>>, %arg2: memref<1x128xf32, #tpu.memory_space<vmem>>, %arg3: memref<1x128xf32, #tpu.memory_space<vmem>>, %arg4: memref<128x128xf32, #tpu.memory_space<vmem>>) attributes {dimension_semantics = [#tpu.dimension_semantics<parallel>], iteration_bounds = array<i64: 1>, scalar_prefetch = 0 : i64, scratch_operands = 0 : i64, tpu.core_type = #tpu.core_type<tc>, window_params = [{transform_indices = @transform_0, window_bounds = array<i64: 128, 128>}, {pipeline_mode = #tpu.pipeline_mode<synchronous>, transform_indices = @transform_1, window_bounds = array<i64: 1, 128>}, {pipeline_mode = #tpu.pipeline_mode<synchronous>, transform_indices = @transform_2, window_bounds = array<i64: 1, 128>}, {transform_indices = @transform_3, window_bounds = array<i64: 128, 128>}]} {
    %c0 = arith.constant 0 : index
    %c0_0 = arith.constant 0 : index
    %0 = vector.load %arg1[%c0, %c0_0] : memref<128x128xf32, #tpu.memory_space<vmem>>, vector<128x128xf32>
    %c0_1 = arith.constant 0 : index
    %c0_2 = arith.constant 0 : index
    %1 = vector.load %arg2[%c0_1, %c0_2] : memref<1x128xf32, #tpu.memory_space<vmem>>, vector<1x128xf32>
    %2 = vector.broadcast %1 : vector<1x128xf32> to vector<128x128xf32>
    %3 = arith.mulf %0, %2 : vector<128x128xf32>
    %c0_3 = arith.constant 0 : index
    %c0_4 = arith.constant 0 : index
    %4 = vector.load %arg3[%c0_3, %c0_4] : memref<1x128xf32, #tpu.memory_space<vmem>>, vector<1x128xf32>
    %5 = vector.broadcast %4 : vector<1x128xf32> to vector<128x128xf32>
    %6 = arith.addf %3, %5 : vector<128x128xf32>
    %cst = arith.constant 0.000000e+00 : f32
    %7 = vector.broadcast %cst : f32 to vector<128x128xf32>
    %8 = arith.cmpf ogt, %6, %7 : vector<128x128xf32>
    %cst_5 = arith.constant 2.000000e-01 : f32
    %9 = vector.broadcast %cst_5 : f32 to vector<128x128xf32>
    %10 = arith.mulf %9, %6 : vector<128x128xf32>
    %11 = arith.select %8, %6, %10 : vector<128x128xi1>, vector<128x128xf32>
    %c0_6 = arith.constant 0 : index
    %c0_7 = arith.constant 0 : index
    %12 = vector.load %arg4[%c0_6, %c0_7] : memref<128x128xf32, #tpu.memory_space<vmem>>, vector<128x128xf32>
    tpu.vector_store %arg4[%c0_6, %c0_7], %11 {strides = array<i32>} : memref<128x128xf32, #tpu.memory_space<vmem>>, vector<128x128xf32>,
    return
  }
  func.func @transform_0(%arg0: i32) -> (i32, i32) {
    %c0_i32 = arith.constant 0 : i32
    %c0_i32_0 = arith.constant 0 : i32
    return %arg0, %c0_i32 : i32, i32
  }
  func.func @transform_1(%arg0: i32) -> (i32, i32) {
    %c0_i32 = arith.constant 0 : i32
    %c0_i32_0 = arith.constant 0 : i32
    %c0_i32_1 = arith.constant 0 : i32
    return %c0_i32, %c0_i32_0 : i32, i32
  }
  func.func @transform_2(%arg0: i32) -> (i32, i32) {
    %c0_i32 = arith.constant 0 : i32
    %c0_i32_0 = arith.constant 0 : i32
    %c0_i32_1 = arith.constant 0 : i32
    return %c0_i32, %c0_i32_0 : i32, i32
  }
  func.func @transform_3(%arg0: i32) -> (i32, i32) {
    %c0_i32 = arith.constant 0 : i32
    %c0_i32_0 = arith.constant 0 : i32
    return %arg0, %c0_i32 : i32, i32
  }
}

</mosaic_0001>

<llo_original>
// kernel: down_block.3
$region0: #{down_block.3}
  #allocation0 [shape = 'u32[]', space=smem, size = 0x4, offset = 0x4, fixed_abs, tag = 'smem constant byte address 0x4 - core index']
  #allocation1 [shape = 'u32[72,128]{1,0:T(1,128)}', space=vmem, size = 0x9000, scoped, tag = 'internal scratch']
  %s0 = inlined_call_operand.vmem [shape: f32[128,128], index: 0, kind: input, shape index: {}]
  %s1 = inlined_call_operand.vmem [shape: f32[1,128], index: 1, kind: input, shape index: {}]
  %s2 = inlined_call_operand.vmem [shape: f32[1,128], index: 2, kind: input, shape index: {}]
  %s3 = inlined_call_operand.vmem [shape: f32[128,128], index: 3, kind: output, shape index: {}]
  %s4 = sld [smem:[#allocation0]]
  $region22: #{down_block.3} parent=0
    _
  %s6 = ssub.s32 1, %s4
  %s7 = scalar_select 0, %s6, %s4
  // Predicated region
  $region2: #{down_block.3} parent=0 // pred_check
    _
  $region3: #{down_block.3} parent=0 // pred_check_branch
    %9 = sbr.rel (0) target = $region5
  $region4: #{down_block.3} parent=0 // pred_region
    _
  $region5: #{down_block.3} parent=0 // pred_fallthru
    _
  // Predicated region
  $region6: #{down_block.3} parent=0 // pred_check
    _
  $region7: #{down_block.3} parent=0 // pred_check_branch
    %11 = sbr.rel (0) target = $region9
  $region8: #{down_block.3} parent=0 // pred_region
    _
  $region9: #{down_block.3} parent=0 // pred_fallthru
    _
  // Predicated region
  $region10: #{down_block.3} parent=0 // pred_check
    _
  $region11: #{down_block.3} parent=0 // pred_check_branch
    %13 = sbr.rel (0) target = $region13
  $region12: #{down_block.3} parent=0 // pred_region
    _
  $region13: #{down_block.3} parent=0 // pred_fallthru
    _
  %v14 = vld [vmem:[%s0] sm:$0xff]
  %v15 = vld [vmem:[%s0 + $0x8] sm:$0xff]
  %v16 = vld [vmem:[%s0 + $0x10] sm:$0xff]
  %v17 = vld [vmem:[%s0 + $0x18] sm:$0xff]
  %v18 = vld [vmem:[%s0 + $0x20] sm:$0xff]
  %v19 = vld [vmem:[%s0 + $0x28] sm:$0xff]
  %v20 = vld [vmem:[%s0 + $0x30] sm:$0xff]
  %v21 = vld [vmem:[%s0 + $0x38] sm:$0xff]
  %v22 = vld [vmem:[%s0 + $0x40] sm:$0xff]
  %v23 = vld [vmem:[%s0 + $0x48] sm:$0xff]
  %v24 = vld [vmem:[%s0 + $0x50] sm:$0xff]
  %v25 = vld [vmem:[%s0 + $0x58] sm:$0xff]
  %v26 = vld [vmem:[%s0 + $0x60] sm:$0xff]
  %v27 = vld [vmem:[%s0 + $0x68] sm:$0xff]
  %v28 = vld [vmem:[%s0 + $0x70] sm:$0xff]
  %v29 = vld [vmem:[%s0 + $0x78] sm:$0xff]
  %v30 = vld [vmem:[%s1] sm:$0x1]
  %v32 = vperm.slane %v30, 0
  %v34 = vmul.f32 %v14, %v32
  %v35 = vmul.f32 %v15, %v32
  %v36 = vmul.f32 %v16, %v32
  %v37 = vmul.f32 %v17, %v32
  %v38 = vmul.f32 %v18, %v32
  %v39 = vmul.f32 %v19, %v32
  %v40 = vmul.f32 %v20, %v32
  %v41 = vmul.f32 %v21, %v32
  %v42 = vmul.f32 %v22, %v32
  %v43 = vmul.f32 %v23, %v32
  %v44 = vmul.f32 %v24, %v32
  %v45 = vmul.f32 %v25, %v32
  %v46 = vmul.f32 %v26, %v32
  %v47 = vmul.f32 %v27, %v32
  %v48 = vmul.f32 %v28, %v32
  %v49 = vmul.f32 %v29, %v32
  %v50 = vld [vmem:[%s2] sm:$0x1]
  %v52 = vperm.slane %v50, 0
  %v54 = vadd.f32 %v34, %v52
  %v55 = vadd.f32 %v35, %v52
  %v56 = vadd.f32 %v36, %v52
  %v57 = vadd.f32 %v37, %v52
  %v58 = vadd.f32 %v38, %v52
  %v59 = vadd.f32 %v39, %v52
  %v60 = vadd.f32 %v40, %v52
  %v61 = vadd.f32 %v41, %v52
  %v62 = vadd.f32 %v42, %v52
  %v63 = vadd.f32 %v43, %v52
  %v64 = vadd.f32 %v44, %v52
  %v65 = vadd.f32 %v45, %v52
  %v66 = vadd.f32 %v46, %v52
  %v67 = vadd.f32 %v47, %v52
  %v68 = vadd.f32 %v48, %v52
  %v69 = vadd.f32 %v49, %v52
  %vm70 = vcmp.gt.f32.partialorder %v54, 0.0
  %vm71 = vcmp.gt.f32.partialorder %v55, 0.0
  %vm72 = vcmp.gt.f32.partialorder %v56, 0.0
  %vm73 = vcmp.gt.f32.partialorder %v57, 0.0
  %vm74 = vcmp.gt.f32.partialorder %v58, 0.0
  %vm75 = vcmp.gt.f32.partialorder %v59, 0.0
  %vm76 = vcmp.gt.f32.partialorder %v60, 0.0
  %vm77 = vcmp.gt.f32.partialorder %v61, 0.0
  %vm78 = vcmp.gt.f32.partialorder %v62, 0.0
  %vm79 = vcmp.gt.f32.partialorder %v63, 0.0
  %vm80 = vcmp.gt.f32.partialorder %v64, 0.0
  %vm81 = vcmp.gt.f32.partialorder %v65, 0.0
  %vm82 = vcmp.gt.f32.partialorder %v66, 0.0
  %vm83 = vcmp.gt.f32.partialorder %v67, 0.0
  %vm84 = vcmp.gt.f32.partialorder %v68, 0.0
  %vm85 = vcmp.gt.f32.partialorder %v69, 0.0
  %v86 = vmul.f32 %v54, 0.2
  %v87 = vmul.f32 %v55, 0.2
  %v88 = vmul.f32 %v56, 0.2
  %v89 = vmul.f32 %v57, 0.2
  %v90 = vmul.f32 %v58, 0.2
  %v91 = vmul.f32 %v59, 0.2
  %v92 = vmul.f32 %v60, 0.2
  %v93 = vmul.f32 %v61, 0.2
  %v94 = vmul.f32 %v62, 0.2
  %v95 = vmul.f32 %v63, 0.2
  %v96 = vmul.f32 %v64, 0.2
  %v97 = vmul.f32 %v65, 0.2
  %v98 = vmul.f32 %v66, 0.2
  %v99 = vmul.f32 %v67, 0.2
  %v100 = vmul.f32 %v68, 0.2
  %v101 = vmul.f32 %v69, 0.2
  %v102 = vsel %vm70, %v54, %v86
  %v103 = vsel %vm71, %v55, %v87
  %v104 = vsel %vm72, %v56, %v88
  %v105 = vsel %vm73, %v57, %v89
  %v106 = vsel %vm74, %v58, %v90
  %v107 = vsel %vm75, %v59, %v91
  %v108 = vsel %vm76, %v60, %v92
  %v109 = vsel %vm77, %v61, %v93
  %v110 = vsel %vm78, %v62, %v94
  %v111 = vsel %vm79, %v63, %v95
  %v112 = vsel %vm80, %v64, %v96
  %v113 = vsel %vm81, %v65, %v97
  %v114 = vsel %vm82, %v66, %v98
  %v115 = vsel %vm83, %v67, %v99
  %v116 = vsel %vm84, %v68, %v100
  %v117 = vsel %vm85, %v69, %v101
  %118 = vst [vmem:[%s3] sm:$0xff] %v102
  %119 = vst [vmem:[%s3 + $0x8] sm:$0xff] %v103
  %120 = vst [vmem:[%s3 + $0x10] sm:$0xff] %v104
  %121 = vst [vmem:[%s3 + $0x18] sm:$0xff] %v105
  %122 = vst [vmem:[%s3 + $0x20] sm:$0xff] %v106
  %123 = vst [vmem:[%s3 + $0x28] sm:$0xff] %v107
  %124 = vst [vmem:[%s3 + $0x30] sm:$0xff] %v108
  %125 = vst [vmem:[%s3 + $0x38] sm:$0xff] %v109
  %126 = vst [vmem:[%s3 + $0x40] sm:$0xff] %v110
  %127 = vst [vmem:[%s3 + $0x48] sm:$0xff] %v111
  %128 = vst [vmem:[%s3 + $0x50] sm:$0xff] %v112
  %129 = vst [vmem:[%s3 + $0x58] sm:$0xff] %v113
  %130 = vst [vmem:[%s3 + $0x60] sm:$0xff] %v114
  %131 = vst [vmem:[%s3 + $0x68] sm:$0xff] %v115
  %132 = vst [vmem:[%s3 + $0x70] sm:$0xff] %v116
  %133 = vst [vmem:[%s3 + $0x78] sm:$0xff] %v117
  // Predicated region
  $region14: #{down_block.3} parent=0 // pred_check
    _
  $region15: #{down_block.3} parent=0 // pred_check_branch
    %135 = sbr.rel (0) target = $region17
  $region16: #{down_block.3} parent=0 // pred_region
    _
  $region17: #{down_block.3} parent=0 // pred_fallthru
    _
  // Predicated region
  $region18: #{down_block.3} parent=0 // pred_check
    _
  $region19: #{down_block.3} parent=0 // pred_check_branch
    %137 = sbr.rel (0) target = $region21
  $region20: #{down_block.3} parent=0 // pred_region
    _
  $region21: #{down_block.3} parent=0 // pred_fallthru
    _

// kernel: down_block.2
$region0: #{down_block.2}
  #allocation0 [shape = 'u32[]', space=smem, size = 0x4, offset = 0x4, fixed_abs, tag = 'smem constant byte address 0x4 - core index']
  #allocation1 [shape = 'u32[72,128]{1,0:T(1,128)}', space=vmem, size = 0x9000, scoped, tag = 'internal scratch']
  %s0 = inlined_call_operand.vmem [shape: bf16[128,128], index: 0, kind: input, shape index: {}]
  %s1 = inlined_call_operand.vmem [shape: bf16[128,128], index: 1, kind: input, shape index: {}]
  %s2 = inlined_call_operand.vmem [shape: f32[128,128], index: 2, kind: output, shape index: {0}]
  %s3 = inlined_call_operand.vmem [shape: f32[1,128], index: 3, kind: output, shape index: {1}]
  %s4 = inlined_call_operand.vmem [shape: f32[1,128], index: 4, kind: output, shape index: {2}]
  %5 = xla_tuple %s2, %s3, %s4
  %s6 = sld [smem:[#allocation0]]
  $region38: #{down_block.2} parent=0
    _
  %s8 = ssub.s32 1, %s6
  %s9 = scalar_select 0, %s8, %s6
  // Predicated region
  $region2: #{down_block.2} parent=0 // pred_check
    _
  $region3: #{down_block.2} parent=0 // pred_check_branch
    %11 = sbr.rel (0) target = $region5
  $region4: #{down_block.2} parent=0 // pred_region
    _
  $region5: #{down_block.2} parent=0 // pred_fallthru
    _
  // Predicated region
  $region6: #{down_block.2} parent=0 // pred_check
    _
  $region7: #{down_block.2} parent=0 // pred_check_branch
    %13 = sbr.rel (0) target = $region9
  $region8: #{down_block.2} parent=0 // pred_region
    _
  $region9: #{down_block.2} parent=0 // pred_fallthru
    _
  %p14 = scmp.eq.s32.totalorder 0, 0
  // Predicated region
  $region10: #{down_block.2} parent=0 // pred_check
    %p15 = pneg %p14
  $region11: #{down_block.2} parent=0 // pred_check_branch
    %17 = sbr.rel (%p15) target = $region13
  $region12: #{down_block.2} parent=0 // pred_region
    %18 = vst [vmem:[%s3] sm:$0x1] 0.0
    %19 = vst [vmem:[%s4] sm:$0x1] 0.0
  $region13: #{down_block.2} parent=0 // pred_fallthru
    _
  %v20 = vld [vmem:[%s0] sm:$0xf]
  %v21 = vld [vmem:[%s0 + $0x4] sm:$0xf]
  %v22 = vld [vmem:[%s0 + $0x8] sm:$0xf]
  %v23 = vld [vmem:[%s0 + $0xc] sm:$0xf]
  %v24 = vld [vmem:[%s0 + $0x10] sm:$0xf]
  %v25 = vld [vmem:[%s0 + $0x14] sm:$0xf]
  %v26 = vld [vmem:[%s0 + $0x18] sm:$0xf]
  %v27 = vld [vmem:[%s0 + $0x1c] sm:$0xf]
  %v28 = vld [vmem:[%s0 + $0x20] sm:$0xf]
  %v29 = vld [vmem:[%s0 + $0x24] sm:$0xf]
  %v30 = vld [vmem:[%s0 + $0x28] sm:$0xf]
  %v31 = vld [vmem:[%s0 + $0x2c] sm:$0xf]
  %v32 = vld [vmem:[%s0 + $0x30] sm:$0xf]
  %v33 = vld [vmem:[%s0 + $0x34] sm:$0xf]
  %v34 = vld [vmem:[%s0 + $0x38] sm:$0xf]
  %v35 = vld [vmem:[%s0 + $0x3c] sm:$0xf]
  %v36 = vld [vmem:[%s1] sm:$0xf]
  %v37 = vld [vmem:[%s1 + $0x4] sm:$0xf]
  %v38 = vld [vmem:[%s1 + $0x8] sm:$0xf]
  %v39 = vld [vmem:[%s1 + $0xc] sm:$0xf]
  %v40 = vld [vmem:[%s1 + $0x10] sm:$0xf]
  %v41 = vld [vmem:[%s1 + $0x14] sm:$0xf]
  %v42 = vld [vmem:[%s1 + $0x18] sm:$0xf]
  %v43 = vld [vmem:[%s1 + $0x1c] sm:$0xf]
  %v44 = vld [vmem:[%s1 + $0x20] sm:$0xf]
  %v45 = vld [vmem:[%s1 + $0x24] sm:$0xf]
  %v46 = vld [vmem:[%s1 + $0x28] sm:$0xf]
  %v47 = vld [vmem:[%s1 + $0x2c] sm:$0xf]
  %v48 = vld [vmem:[%s1 + $0x30] sm:$0xf]
  %v49 = vld [vmem:[%s1 + $0x34] sm:$0xf]
  %v50 = vld [vmem:[%s1 + $0x38] sm:$0xf]
  %v51 = vld [vmem:[%s1 + $0x3c] sm:$0xf]
  %v68 = vunpack.c.l.b16 %v20
  %v69 = vunpack.c.l.b16 %v21
  %v70 = vunpack.c.l.b16 %v22
  %v71 = vunpack.c.l.b16 %v23
  %v72 = vunpack.c.l.b16 %v24
  %v73 = vunpack.c.l.b16 %v25
  %v74 = vunpack.c.l.b16 %v26
  %v75 = vunpack.c.l.b16 %v27
  %v76 = vunpack.c.l.b16 %v28
  %v77 = vunpack.c.l.b16 %v29
  %v78 = vunpack.c.l.b16 %v30
  %v79 = vunpack.c.l.b16 %v31
  %v80 = vunpack.c.l.b16 %v32
  %v81 = vunpack.c.l.b16 %v33
  %v82 = vunpack.c.l.b16 %v34
  %v83 = vunpack.c.l.b16 %v35
  %v84 = vpack.c.b16 %v69, %v68
  %v85 = vpack.c.b16 %v71, %v70
  %v86 = vpack.c.b16 %v73, %v72
  %v87 = vpack.c.b16 %v75, %v74
  %v88 = vpack.c.b16 %v77, %v76
  %v89 = vpack.c.b16 %v79, %v78
  %v90 = vpack.c.b16 %v81, %v80
  %v91 = vpack.c.b16 %v83, %v82
  %v116 = vunpack.c.l.b16 %v36
  %v117 = vunpack.c.l.b16 %v37
  %v118 = vunpack.c.l.b16 %v38
  %v119 = vunpack.c.l.b16 %v39
  %v120 = vunpack.c.l.b16 %v40
  %v121 = vunpack.c.l.b16 %v41
  %v122 = vunpack.c.l.b16 %v42
  %v123 = vunpack.c.l.b16 %v43
  %v124 = vunpack.c.l.b16 %v44
  %v125 = vunpack.c.l.b16 %v45
  %v126 = vunpack.c.l.b16 %v46
  %v127 = vunpack.c.l.b16 %v47
  %v128 = vunpack.c.l.b16 %v48
  %v129 = vunpack.c.l.b16 %v49
  %v130 = vunpack.c.l.b16 %v50
  %v131 = vunpack.c.l.b16 %v51
  %v132 = vpack.c.b16 %v117, %v116
  %v133 = vpack.c.b16 %v119, %v118
  %v134 = vpack.c.b16 %v121, %v120
  %v135 = vpack.c.b16 %v123, %v122
  %v136 = vpack.c.b16 %v125, %v124
  %v137 = vpack.c.b16 %v127, %v126
  %v138 = vpack.c.b16 %v129, %v128
  %v139 = vpack.c.b16 %v131, %v130
  %148 = vmatpush.bf16.msra.mxu0 %v139
  %149 = vmatpush.bf16.msra.mxu0 %v138
  %150 = vmatpush.bf16.msra.mxu0 %v137
  %151 = vmatpush.bf16.msra.mxu0 %v136
  %152 = vmatpush.bf16.msra.mxu0 %v135
  %153 = vmatpush.bf16.msra.mxu0 %v134
  %154 = vmatpush.bf16.msra.mxu0 %v133
  %155 = vmatpush.bf16.msra.mxu0 %v132
  %156 = vmatmul.bf16.gmra.mxu0 %v84
  %v157 = vpop.f32.mrf.mxu0
  %v158 = vadd.f32 0.0, %v157
  %v159 = vpop.f32.mrf.mxu0
  %v160 = vadd.f32 0.0, %v159
  %161 = vmatmul.bf16.gmra.mxu0 %v85
  %v162 = vpop.f32.mrf.mxu0
  %v163 = vadd.f32 0.0, %v162
  %v164 = vpop.f32.mrf.mxu0
  %v165 = vadd.f32 0.0, %v164
  %166 = vmatmul.bf16.gmra.mxu0 %v86
  %v167 = vpop.f32.mrf.mxu0
  %v168 = vadd.f32 0.0, %v167
  %v169 = vpop.f32.mrf.mxu0
  %v170 = vadd.f32 0.0, %v169
  %171 = vmatmul.bf16.gmra.mxu0 %v87
  %v172 = vpop.f32.mrf.mxu0
  %v173 = vadd.f32 0.0, %v172
  %v174 = vpop.f32.mrf.mxu0
  %v175 = vadd.f32 0.0, %v174
  %176 = vmatmul.bf16.gmra.mxu0 %v88
  %v177 = vpop.f32.mrf.mxu0
  %v178 = vadd.f32 0.0, %v177
  %v179 = vpop.f32.mrf.mxu0
  %v180 = vadd.f32 0.0, %v179
  %181 = vmatmul.bf16.gmra.mxu0 %v89
  %v182 = vpop.f32.mrf.mxu0
  %v183 = vadd.f32 0.0, %v182
  %v184 = vpop.f32.mrf.mxu0
  %v185 = vadd.f32 0.0, %v184
  %186 = vmatmul.bf16.gmra.mxu0 %v90
  %v187 = vpop.f32.mrf.mxu0
  %v188 = vadd.f32 0.0, %v187
  %v189 = vpop.f32.mrf.mxu0
  %v190 = vadd.f32 0.0, %v189
  %191 = vmatmul.bf16.gmra.mxu0 %v91
  %v192 = vpop.f32.mrf.mxu0
  %v193 = vadd.f32 0.0, %v192
  %v194 = vpop.f32.mrf.mxu0
  %v195 = vadd.f32 0.0, %v194
  %196 = vdwg.mxu0
  %197 = vst [vmem:[%s2] sm:$0xff] %v158
  %198 = vst [vmem:[%s2 + $0x8] sm:$0xff] %v160
  %199 = vst [vmem:[%s2 + $0x10] sm:$0xff] %v163
  %200 = vst [vmem:[%s2 + $0x18] sm:$0xff] %v165
  %201 = vst [vmem:[%s2 + $0x20] sm:$0xff] %v168
  %202 = vst [vmem:[%s2 + $0x28] sm:$0xff] %v170
  %203 = vst [vmem:[%s2 + $0x30] sm:$0xff] %v173
  %204 = vst [vmem:[%s2 + $0x38] sm:$0xff] %v175
  %205 = vst [vmem:[%s2 + $0x40] sm:$0xff] %v178
  %206 = vst [vmem:[%s2 + $0x48] sm:$0xff] %v180
  %207 = vst [vmem:[%s2 + $0x50] sm:$0xff] %v183
  %208 = vst [vmem:[%s2 + $0x58] sm:$0xff] %v185
  %209 = vst [vmem:[%s2 + $0x60] sm:$0xff] %v188
  %210 = vst [vmem:[%s2 + $0x68] sm:$0xff] %v190
  %211 = vst [vmem:[%s2 + $0x70] sm:$0xff] %v193
  %212 = vst [vmem:[%s2 + $0x78] sm:$0xff] %v195
  %v213 = vld [vmem:[%s3] sm:$0x1]
  %v214 = vadd.f32 %v158, %v160
  %v215 = vadd.f32 %v214, %v163
  %v216 = vadd.f32 %v215, %v165
  %v217 = vadd.f32 %v216, %v168
  %v218 = vadd.f32 %v217, %v170
  %v219 = vadd.f32 %v218, %v173
  %v220 = vadd.f32 %v219, %v175
  %v221 = vadd.f32 %v220, %v178
  %v222 = vadd.f32 %v221, %v180
  %v223 = vadd.f32 %v222, %v183
  %v224 = vadd.f32 %v223, %v185
  %v225 = vadd.f32 %v224, %v188
  %v226 = vadd.f32 %v225, %v190
  %v227 = vadd.f32 %v226, %v193
  %v228 = vadd.f32 %v227, %v195
  %v229 = vrot.slane %v228, 4
  %v230 = vadd.f32 %v228, %v229
  %v231 = vrot.slane %v230, 2
  %v232 = vadd.f32 %v230, %v231
  %v233 = vrot.slane %v232, 1
  %v234 = vadd.f32 %v232, %v233
  %v235 = vadd.f32 %v213, %v234
  %236 = vst [vmem:[%s3] sm:$0x1] %v235
  %v237 = vld [vmem:[%s4] sm:$0x1]
  %v238 = vmul.f32 %v158, %v158
  %v239 = vmul.f32 %v160, %v160
  %v240 = vmul.f32 %v163, %v163
  %v241 = vmul.f32 %v165, %v165
  %v242 = vmul.f32 %v168, %v168
  %v243 = vmul.f32 %v170, %v170
  %v244 = vmul.f32 %v173, %v173
  %v245 = vmul.f32 %v175, %v175
  %v246 = vmul.f32 %v178, %v178
  %v247 = vmul.f32 %v180, %v180
  %v248 = vmul.f32 %v183, %v183
  %v249 = vmul.f32 %v185, %v185
  %v250 = vmul.f32 %v188, %v188
  %v251 = vmul.f32 %v190, %v190
  %v252 = vmul.f32 %v193, %v193
  %v253 = vmul.f32 %v195, %v195
  %v254 = vadd.f32 %v238, %v239
  %v255 = vadd.f32 %v254, %v240
  %v256 = vadd.f32 %v255, %v241
  %v257 = vadd.f32 %v256, %v242
  %v258 = vadd.f32 %v257, %v243
  %v259 = vadd.f32 %v258, %v244
  %v260 = vadd.f32 %v259, %v245
  %v261 = vadd.f32 %v260, %v246
  %v262 = vadd.f32 %v261, %v247
  %v263 = vadd.f32 %v262, %v248
  %v264 = vadd.f32 %v263, %v249
  %v265 = vadd.f32 %v264, %v250
  %v266 = vadd.f32 %v265, %v251
  %v267 = vadd.f32 %v266, %v252
  %v268 = vadd.f32 %v267, %v253
  %v269 = vrot.slane %v268, 4
  %v270 = vadd.f32 %v268, %v269
  %v271 = vrot.slane %v270, 2
  %v272 = vadd.f32 %v270, %v271
  %v273 = vrot.slane %v272, 1
  %v274 = vadd.f32 %v272, %v273
  %v275 = vadd.f32 %v237, %v274
  %276 = vst [vmem:[%s4] sm:$0x1] %v275
  // Predicated region
  $region14: #{down_block.2} parent=0 // pred_check
    _
  $region15: #{down_block.2} parent=0 // pred_check_branch
    %278 = sbr.rel (0) target = $region17
  $region16: #{down_block.2} parent=0 // pred_region
    _
  $region17: #{down_block.2} parent=0 // pred_fallthru
    _
  // Predicated region
  $region18: #{down_block.2} parent=0 // pred_check
    _
  $region19: #{down_block.2} parent=0 // pred_check_branch
    %280 = sbr.rel (0) target = $region21
  $region20: #{down_block.2} parent=0 // pred_region
    _
  $region21: #{down_block.2} parent=0 // pred_fallthru
    _
  // Predicated region
  $region22: #{down_block.2} parent=0 // pred_check
    _
  $region23: #{down_block.2} parent=0 // pred_check_branch
    %282 = sbr.rel (0) target = $region25
  $region24: #{down_block.2} parent=0 // pred_region
    _
  $region25: #{down_block.2} parent=0 // pred_fallthru
    _
  // Predicated region
  $region26: #{down_block.2} parent=0 // pred_check
    _
  $region27: #{down_block.2} parent=0 // pred_check_branch
    %284 = sbr.rel (0) target = $region29
  $region28: #{down_block.2} parent=0 // pred_region
    _
  $region29: #{down_block.2} parent=0 // pred_fallthru
    _
  // Predicated region
  $region30: #{down_block.2} parent=0 // pred_check
    _
  $region31: #{down_block.2} parent=0 // pred_check_branch
    %286 = sbr.rel (0) target = $region33
  $region32: #{down_block.2} parent=0 // pred_region
    _
  $region33: #{down_block.2} parent=0 // pred_fallthru
    _
  // Predicated region
  $region34: #{down_block.2} parent=0 // pred_check
    _
  $region35: #{down_block.2} parent=0 // pred_check_branch
    %288 = sbr.rel (0) target = $region37
  $region36: #{down_block.2} parent=0 // pred_region
    _
  $region37: #{down_block.2} parent=0 // pred_fallthru
    _

</llo_original>
